<compile_context>
chip_gen: v5e
topology: v5e:2x2
jax: 0.10.0
libtpu: 0.0.40
codegen_flags: <defaults>
</compile_context>

<pallas_src>
import jax
import jax.numpy as jnp
from jax.experimental import pallas as pl
from jax.experimental.pallas import tpu as pltpu


def _round_up(x, m):
    return (x + m - 1) // m * m


def _vmem_budget_bytes():
    """~75% of per-core VMEM: ~48 MiB on v7x, ~96 MiB on v5e/v6e."""
    cap = 128 * 1024 * 1024
    try:
        info = pltpu.get_tpu_info()
        cap = int(getattr(info, "vmem_capacity_bytes", cap)) or cap
    except Exception:
        pass
    return (cap * 3) // 4


def _pick_tile(dim, align, cap):
    """Largest tile (multiple of `align`, <= cap) minimizing the padded extent."""
    cap = max(align, min(cap, _round_up(dim, align)))
    best, best_pad = align, _round_up(dim, align)
    t = align
    while t <= cap:
        pad = _round_up(dim, t)
        if pad <= best_pad:          # ties -> prefer the larger tile
            best, best_pad = t, pad
        t += align
    return best


def _vmem_bytes(tm, tn, tk, in_bytes, out_bytes):
    # Double-buffered x / w / scale-shift / out blocks + f32 accumulator.
    return (2 * tm * tk * in_bytes
            + 2 * tk * tn * in_bytes
            + 2 * 2 * tn * 4
            + 2 * tm * tn * out_bytes
            + tm * tn * 4)


def _linear_block_kernel(x_ref, w_ref, ss_ref, o_ref, acc_ref):
    # Grid = (M//tm, N//tn, K//tk); K (reduction) is the innermost axis.
    @pl.when(pl.program_id(2) == 0)
    def _():
        acc_ref[...] = jnp.zeros_like(acc_ref)

    # MXU matmul of the (tm, tk) x (tk, tn) tiles, accumulated in f32.
    acc_ref[...] += jnp.dot(x_ref[...], w_ref[...],
                            preferred_element_type=jnp.float32)

    # Epilogue only on the last K step: folded BatchNorm (scale/shift),
    # LeakyReLU(0.1), Dropout (identity in eval), cast and store.
    @pl.when(pl.program_id(2) == pl.num_programs(2) - 1)
    def _():
        ss = ss_ref[...]                                  # (2, tn) f32
        y = acc_ref[...] * ss[0:1, :] + ss[1:2, :]        # BN (eval, folded)
        y = jnp.maximum(y, 0.1 * y)                       # LeakyReLU(0.1)
        o_ref[...] = y.astype(o_ref.dtype)                # Dropout = identity


def make_linear_block(weight_t, gamma, beta, running_mean, running_var, *,
                      eps=1e-5, compute_dtype=jnp.bfloat16, out_dtype=None,
                      tm=512, tn=512, tk=512):
    """Pre-pack the weight + folded BN once; returns apply(x) -> (B, N).

    weight_t: (K, N) = nn.Linear(in, out, bias=False).weight.T
    gamma/beta/running_mean/running_var: (N,) BatchNorm1d params / stats
    """
    K, N = weight_t.shape
    budget = _vmem_budget_bytes()
    in_bytes = jnp.dtype(compute_dtype).itemsize

    # tn / tk chosen to minimize padding waste (lane dims multiples of 128).
    tn = _pick_tile(N, 128, tn)
    tk = _pick_tile(K, 128, tk)
    Kp, Np = _round_up(K, tk), _round_up(N, tn)

    # Fold eval-mode BatchNorm into per-feature scale/shift, packed (2, Np).
    scale = (gamma / jnp.sqrt(running_var + eps)).astype(jnp.float32)
    shift = (beta - running_mean * scale).astype(jnp.float32)
    ssp = jnp.zeros((2, Np), jnp.float32).at[0, :N].set(scale).at[1, :N].set(shift)

    # Pre-pack the weight ONCE (cast + pad); skip the copy when already aligned.
    wp = weight_t.astype(compute_dtype)
    if (K, N) != (Kp, Np):
        wp = jnp.zeros((Kp, Np), compute_dtype).at[:K, :N].set(wp)

    def apply(x):
        B, Kx = x.shape
        assert Kx == K, f"expected {K} input features, got {Kx}"
        odt = out_dtype if out_dtype is not None else x.dtype
        out_bytes = jnp.dtype(odt).itemsize

        tm_ = _pick_tile(B, 16, tm)   # sublane dim multiple of 16 (bf16 packing)
        # Shrink tm if the tiling would exceed the VMEM budget (tk kept large).
        while tm_ > 16 and _vmem_bytes(tm_, tn, tk, in_bytes, out_bytes) > budget:
            tm_ = max(16, _round_up(tm_ // 2, 16))
        Mp = _round_up(B, tm_)
        # v7x megacore: ensure at least one 'parallel' axis has >= 2 blocks.
        if Mp // tm_ == 1 and Np // tn == 1 and tm_ >= 32:
            tm_ = _round_up(tm_ // 2, 16)
            Mp = _round_up(B, tm_)

        # Zero-pad x only if needed (padded K contributes 0 to the sum).
        xp = x.astype(compute_dtype)
        if (B, K) != (Mp, Kp):
            xp = jnp.zeros((Mp, Kp), compute_dtype).at[:B, :K].set(xp)

        grid = (Mp // tm_, Np // tn, Kp // tk)

        out = pl.pallas_call(
            _linear_block_kernel,
            out_shape=jax.ShapeDtypeStruct((Mp, Np), odt),
            grid_spec=pltpu.PrefetchScalarGridSpec(
                num_scalar_prefetch=0,
                grid=grid,
                in_specs=[
                    pl.BlockSpec((tm_, tk), lambda m, n, k: (m, k)),   # x tile
                    pl.BlockSpec((tk, tn), lambda m, n, k: (k, n)),    # w tile
                    pl.BlockSpec((2, tn), lambda m, n, k: (0, n)),     # scale/shift
                ],
                out_specs=pl.BlockSpec((tm_, tn), lambda m, n, k: (m, n)),
                scratch_shapes=[pltpu.VMEM((tm_, tn), jnp.float32)],
            ),
            compiler_params=pltpu.CompilerParams(
                dimension_semantics=("parallel", "parallel", "arbitrary"),
                vmem_limit_bytes=int(budget),
            ),
        )(xp, wp, ssp)

        return out[:B, :N]

    return apply


def linear_block(x, weight_t, gamma, beta, running_mean, running_var, *,
                 eps=1e-5, compute_dtype=jnp.bfloat16, out_dtype=None,
                 tm=512, tn=512, tk=512):
    """One-shot convenience wrapper (packs params, then applies)."""
    return make_linear_block(
        weight_t, gamma, beta, running_mean, running_var, eps=eps,
        compute_dtype=compute_dtype, out_dtype=out_dtype,
        tm=tm, tn=tn, tk=tk)(x)


def linear_block_ref(x, weight_t, gamma, beta, running_mean, running_var,
                     eps=1e-5):
    y = jnp.dot(x, weight_t, precision=jax.lax.Precision.HIGHEST)
    y = (y - running_mean) / jnp.sqrt(running_var + eps) * gamma + beta
    return jnp.where(y >= 0, y, 0.1 * y)


def _make_inputs(key, B, K, N):
    k_x, k_w, k_g, k_b, k_m, k_v = jax.random.split(key, 6)
    x = jax.random.normal(k_x, (B, K), dtype=jnp.float32)
    # nn.Linear(in, out, bias=False).weight is (out, in); we store transposed.
    weight_t = jax.random.normal(k_w, (K, N), dtype=jnp.float32) * 0.1
    gamma = 1.0 + 0.1 * jax.random.normal(k_g, (N,), dtype=jnp.float32)
    beta = 0.1 * jax.random.normal(k_b, (N,), dtype=jnp.float32)
    running_mean = 0.1 * jax.random.normal(k_m, (N,), dtype=jnp.float32)
    running_var = jnp.abs(
        1.0 + 0.1 * jax.random.normal(k_v, (N,), dtype=jnp.float32))
    return x, weight_t, gamma, beta, running_mean, running_var


if __name__ == "__main__":
    key = jax.random.PRNGKey(0)
    k1, k2 = jax.random.split(key)

    # Test 1: small shape, bf16 MXU feed (default path), loose tolerance.
    B, K, N = 8, 32, 64
    args = _make_inputs(k1, B, K, N)
    out = jax.block_until_ready(linear_block(*args))
    ref = linear_block_ref(*args)
    assert out.shape == (B, N)
    assert jnp.allclose(out, ref, atol=2e-2, rtol=2e-2), "bf16 path mismatch"

    # Test 1b: pre-packed params + bf16 output (halved writeback path).
    fwd = make_linear_block(*args[1:], out_dtype=jnp.bfloat16)
    out_b = jax.block_until_ready(fwd(args[0]))
    assert out_b.shape == (B, N) and out_b.dtype == jnp.bfloat16
    assert jnp.allclose(out_b.astype(jnp.float32), ref, atol=5e-2, rtol=5e-2), \
        "bf16-output path mismatch"

    # Test 2: multi-tile grid (exercises K-accumulation + pl.when epilogue
    # gating + padding-waste tile picking), f32 compute for a tight check.
    B2, K2, N2 = 40, 200, 300
    args2 = _make_inputs(k2, B2, K2, N2)
    out2 = jax.block_until_ready(
        linear_block(*args2, compute_dtype=jnp.float32, tm=16, tn=128, tk=128))
    ref2 = linear_block_ref(*args2)
    assert out2.shape == (B2, N2)
    assert jnp.allclose(out2, ref2, atol=1e-4, rtol=1e-4), "f32 path mismatch"

    print("KERNEL_OK")
</pallas_src>

<mosaic_0001>
module attributes {stable_mosaic.version = 11 : i64} {
  func.func @_linear_block_kernel(%arg0: i32, %arg1: i32, %arg2: i32, %arg3: memref<16x128xbf16, #tpu.memory_space<vmem>>, %arg4: memref<128x128xbf16, #tpu.memory_space<vmem>>, %arg5: memref<2x128xf32, #tpu.memory_space<vmem>>, %arg6: memref<16x128xf32, #tpu.memory_space<vmem>>, %arg7: memref<16x128xf32, #tpu.memory_space<vmem>>) attributes {dimension_semantics = [#tpu.dimension_semantics<parallel>, #tpu.dimension_semantics<parallel>, #tpu.dimension_semantics<arbitrary>], iteration_bounds = array<i64: 1, 1, 1>, scalar_prefetch = 0 : i64, scratch_operands = 1 : i64, tpu.core_type = #tpu.core_type<tc>, window_params = [{transform_indices = @transform_0, window_bounds = array<i64: 16, 128>}, {transform_indices = @transform_1, window_bounds = array<i64: 128, 128>}, {transform_indices = @transform_2, window_bounds = array<i64: 2, 128>}, {transform_indices = @transform_3, window_bounds = array<i64: 16, 128>}]} {
    %c0_i32 = arith.constant 0 : i32
    %0 = arith.cmpi eq, %arg2, %c0_i32 : i32
    %1 = arith.extui %0 : i1 to i32
    %c0_i32_0 = arith.constant 0 : i32
    %2 = arith.cmpi ne, %1, %c0_i32_0 : i32
    scf.if %2 {
      %cst_10 = arith.constant 0.000000e+00 : f32
      %12 = vector.broadcast %cst_10 : f32 to vector<16x128xf32>
      %c0_11 = arith.constant 0 : index
      %c0_12 = arith.constant 0 : index
      %13 = vector.load %arg7[%c0_11, %c0_12] : memref<16x128xf32, #tpu.memory_space<vmem>>, vector<16x128xf32>
      tpu.vector_store %arg7[%c0_11, %c0_12], %12 {strides = array<i32>} : memref<16x128xf32, #tpu.memory_space<vmem>>, vector<16x128xf32>,
    } else {
    }
    %c0 = arith.constant 0 : index
    %c0_1 = arith.constant 0 : index
    %3 = vector.load %arg7[%c0, %c0_1] : memref<16x128xf32, #tpu.memory_space<vmem>>, vector<16x128xf32>
    %c0_2 = arith.constant 0 : index
    %c0_3 = arith.constant 0 : index
    %4 = vector.load %arg3[%c0_2, %c0_3] : memref<16x128xbf16, #tpu.memory_space<vmem>>, vector<16x128xbf16>
    %c0_4 = arith.constant 0 : index
    %c0_5 = arith.constant 0 : index
    %5 = vector.load %arg4[%c0_4, %c0_5] : memref<128x128xbf16, #tpu.memory_space<vmem>>, vector<128x128xbf16>
    %cst = arith.constant dense<0.000000e+00> : vector<16x128xf32>
    %6 = tpu.matmul %4, %5, %cst {dimension_numbers = #tpu.dot_dimension_numbers<[1], [0], [0], [1], [0, 0, 1, 1], [], []>} : vector<16x128xbf16>, vector<128x128xbf16>, vector<16x128xf32> -> vector<16x128xf32>
    %7 = arith.addf %3, %6 : vector<16x128xf32>
    %c0_6 = arith.constant 0 : index
    %c0_7 = arith.constant 0 : index
    %8 = vector.load %arg7[%c0_6, %c0_7] : memref<16x128xf32, #tpu.memory_space<vmem>>, vector<16x128xf32>
    tpu.vector_store %arg7[%c0_6, %c0_7], %7 {strides = array<i32>} : memref<16x128xf32, #tpu.memory_space<vmem>>, vector<16x128xf32>,
    %c0_i32_8 = arith.constant 0 : i32
    %9 = arith.cmpi eq, %arg2, %c0_i32_8 : i32
    %10 = arith.extui %9 : i1 to i32
    %c0_i32_9 = arith.constant 0 : i32
    %11 = arith.cmpi ne, %10, %c0_i32_9 : i32
    scf.if %11 {
      %c0_10 = arith.constant 0 : index
      %c0_11 = arith.constant 0 : index
      %12 = vector.load %arg5[%c0_10, %c0_11] : memref<2x128xf32, #tpu.memory_space<vmem>>, vector<2x128xf32>
      %c0_12 = arith.constant 0 : index
      %c0_13 = arith.constant 0 : index
      %13 = vector.load %arg7[%c0_12, %c0_13] : memref<16x128xf32, #tpu.memory_space<vmem>>, vector<16x128xf32>
      %14 = vector.extract_strided_slice %12 {offsets = [0, 0], sizes = [1, 128], strides = [1, 1]} : vector<2x128xf32> to vector<1x128xf32>
      %15 = vector.broadcast %14 : vector<1x128xf32> to vector<16x128xf32>
      %16 = arith.mulf %13, %15 : vector<16x128xf32>
      %17 = vector.extract_strided_slice %12 {offsets = [1, 0], sizes = [1, 128], strides = [1, 1]} : vector<2x128xf32> to vector<1x128xf32>
      %18 = vector.broadcast %17 : vector<1x128xf32> to vector<16x128xf32>
      %19 = arith.addf %16, %18 : vector<16x128xf32>
      %cst_14 = arith.constant 1.000000e-01 : f32
      %20 = vector.broadcast %cst_14 : f32 to vector<16x128xf32>
      %21 = arith.mulf %20, %19 : vector<16x128xf32>
      %22 = arith.maximumf %19, %21 : vector<16x128xf32>
      %c0_15 = arith.constant 0 : index
      %c0_16 = arith.constant 0 : index
      %23 = vector.load %arg6[%c0_15, %c0_16] : memref<16x128xf32, #tpu.memory_space<vmem>>, vector<16x128xf32>
      tpu.vector_store %arg6[%c0_15, %c0_16], %22 {strides = array<i32>} : memref<16x128xf32, #tpu.memory_space<vmem>>, vector<16x128xf32>,
    } else {
    }
    return
  }
  func.func @transform_0(%arg0: i32, %arg1: i32, %arg2: i32) -> (i32, i32) {
    %c0_i32 = arith.constant 0 : i32
    return %arg0, %arg2 : i32, i32
  }
  func.func @transform_1(%arg0: i32, %arg1: i32, %arg2: i32) -> (i32, i32) {
    %c0_i32 = arith.constant 0 : i32
    return %arg2, %arg1 : i32, i32
  }
  func.func @transform_2(%arg0: i32, %arg1: i32, %arg2: i32) -> (i32, i32) {
    %c0_i32 = arith.constant 0 : i32
    %c0_i32_0 = arith.constant 0 : i32
    return %c0_i32, %arg1 : i32, i32
  }
  func.func @transform_3(%arg0: i32, %arg1: i32, %arg2: i32) -> (i32, i32) {
    %c0_i32 = arith.constant 0 : i32
    return %arg0, %arg1 : i32, i32
  }
}

</mosaic_0001>

<llo_original>
// kernel: tpu_custom_call.1
$region0: #{tpu_custom_call.1}
  #allocation0 [shape = 'u32[]', space=smem, size = 0x4, offset = 0x4, fixed_abs, tag = 'smem constant byte address 0x4 - core index']
  #allocation1 [shape = 'u32[72,128]{1,0:T(1,128)}', space=vmem, size = 0x9000, scoped, tag = 'internal scratch']
  #allocation2 [shape = 'f32[16,128]{1,0:T(8,128)}', space=vmem, size = 0x2000, scoped, tag = 'scratch operand']
  %s0 = inlined_call_operand.hbm [shape: bf16[16,128], index: 0, kind: input, shape index: {}]
  %s1 = inlined_call_operand.hbm [shape: bf16[128,128], index: 1, kind: input, shape index: {}]
  %s2 = inlined_call_operand.hbm [shape: f32[2,128], index: 2, kind: input, shape index: {}]
  %s3 = inlined_call_operand.hbm [shape: f32[16,128], index: 3, kind: output, shape index: {}]
  %s4 = sld [smem:[#allocation0]]
  $region42: #{tpu_custom_call.1} parent=0
    _
  %s6 = ssub.s32 1, %s4
  %s7 = scalar_select 0, %s6, %s4
  $region1: #{tpu_custom_call.1} parent=0
    #allocation3 [shape = 'u8[4096]{0}', space=vmem, size = 0x1000, scoped, tag = 'input window, operand 0, single buffered']
    #allocation4 [shape = 's32[1]{0}', space=sflag, size = 0x4, scoped, tag = 'scoped memory for tpu_custom_call.1']
    #allocation5 [shape = 's32[1]{0}', space=sflag, size = 0x4, scoped, tag = 'scoped memory for tpu_custom_call.1']
    #allocation6 [shape = 'u8[32768]{0}', space=vmem, size = 0x8000, scoped, tag = 'input window, operand 1, single buffered']
    #allocation7 [shape = 's32[1]{0}', space=sflag, size = 0x4, scoped, tag = 'scoped memory for tpu_custom_call.1']
    #allocation8 [shape = 'u8[1024]{0}', space=vmem, size = 0x400, scoped, tag = 'input window, operand 2, single buffered']
    #allocation9 [shape = 'u8[8192]{0}', space=vmem, size = 0x2000, scoped, tag = 'output window, operand 0, single buffered']
    %8 = vsyncpa [#allocation4], 0
    %9 = vsyncpa [#allocation7], 0
    %10 = vsyncpa [#allocation5], 0
    // Predicated region
    $region2: #{tpu_custom_call.1} parent=1 // pred_check
      _
    $region3: #{tpu_custom_call.1} parent=1 // pred_check_branch
      %12 = sbr.rel (0) target = $region5
    $region4: #{tpu_custom_call.1} parent=1 // pred_region
      %14 = vsyncadd [#allocation4], 0
      %s15 = sshll.u32 %s0, 4
      %s16 = int_to_ptr.hbm [resolvable:$true] %s15
      %s17 = sshll.u32 [#allocation3], 4
      %s18 = int_to_ptr.vmem [resolvable:$true] %s17
      %23 = dma.hbm_to_vmem [thread:$0]  %s16, 128, %s18, [#allocation4], 64, 64, 4
    $region5: #{tpu_custom_call.1} parent=1 // pred_fallthru
      _
    // Predicated region
    $region6: #{tpu_custom_call.1} parent=1 // pred_check
      _
    $region7: #{tpu_custom_call.1} parent=1 // pred_check_branch
      %25 = sbr.rel (0) target = $region9
    $region8: #{tpu_custom_call.1} parent=1 // pred_region
      %27 = vsyncadd [#allocation7], 0
      %s28 = sshll.u32 %s1, 4
      %s29 = int_to_ptr.hbm [resolvable:$true] %s28
      %s30 = sshll.u32 [#allocation6], 4
      %s31 = int_to_ptr.vmem [resolvable:$true] %s30
      %36 = dma.hbm_to_vmem [thread:$0]  %s29, 1024, %s31, [#allocation7], 64, 64, 4
    $region9: #{tpu_custom_call.1} parent=1 // pred_fallthru
      _
    // Predicated region
    $region10: #{tpu_custom_call.1} parent=1 // pred_check
      _
    $region11: #{tpu_custom_call.1} parent=1 // pred_check_branch
      %38 = sbr.rel (0) target = $region13
    $region12: #{tpu_custom_call.1} parent=1 // pred_region
      %40 = vsyncadd [#allocation7], 0
      %s42 = sshll.u32 %s2, 4
      %s43 = int_to_ptr.hbm [resolvable:$true] %s42
      %s44 = sshll.u32 [#allocation8], 4
      %s45 = int_to_ptr.vmem [resolvable:$true] %s44
      %47 = dma.hbm_to_vmem [thread:$0]  %s43, 32, %s45, [#allocation7]
    $region13: #{tpu_custom_call.1} parent=1 // pred_fallthru
      _
    // Predicated region
    $region14: #{tpu_custom_call.1} parent=1 // pred_check
      _
    $region15: #{tpu_custom_call.1} parent=1 // pred_check_branch
      %49 = sbr.rel (0) target = $region17
    $region16: #{tpu_custom_call.1} parent=1 // pred_region
      %51 = dma.done [#allocation4], 128
    $region17: #{tpu_custom_call.1} parent=1 // pred_fallthru
      _
    // Predicated region
    $region18: #{tpu_custom_call.1} parent=1 // pred_check
      _
    $region19: #{tpu_custom_call.1} parent=1 // pred_check_branch
      %53 = sbr.rel (0) target = $region21
    $region20: #{tpu_custom_call.1} parent=1 // pred_region
      %55 = dma.done [#allocation7], 1024
    $region21: #{tpu_custom_call.1} parent=1 // pred_fallthru
      _
    // Predicated region
    $region22: #{tpu_custom_call.1} parent=1 // pred_check
      _
    $region23: #{tpu_custom_call.1} parent=1 // pred_check_branch
      %57 = sbr.rel (0) target = $region25
    $region24: #{tpu_custom_call.1} parent=1 // pred_region
      %59 = dma.done [#allocation7], 32
    $region25: #{tpu_custom_call.1} parent=1 // pred_fallthru
      _
    %p60 = scmp.eq.s32.totalorder 0, 0
    // Predicated region
    $region26: #{tpu_custom_call.1} parent=1 // pred_check
      %p61 = pneg %p60
    $region27: #{tpu_custom_call.1} parent=1 // pred_check_branch
      %63 = sbr.rel (%p61) target = $region29
    $region28: #{tpu_custom_call.1} parent=1 // pred_region
      %64 = vst [vmem:[#allocation2] sm:$0xff] 0.0
      %65 = vst [vmem:[#allocation2 + $0x8] sm:$0xff] 0.0
    $region29: #{tpu_custom_call.1} parent=1 // pred_fallthru
      _
    %v66 = vld [vmem:[#allocation2] sm:$0xff]
    %v67 = vld [vmem:[#allocation2 + $0x8] sm:$0xff]
    %v68 = vld [vmem:[#allocation3] sm:$0xf]
    %v69 = vld [vmem:[#allocation3 + $0x4] sm:$0xf]
    %v70 = vld [vmem:[#allocation6] sm:$0xf]
    %v71 = vld [vmem:[#allocation6 + $0x4] sm:$0xf]
    %v72 = vld [vmem:[#allocation6 + $0x8] sm:$0xf]
    %v73 = vld [vmem:[#allocation6 + $0xc] sm:$0xf]
    %v74 = vld [vmem:[#allocation6 + $0x10] sm:$0xf]
    %v75 = vld [vmem:[#allocation6 + $0x14] sm:$0xf]
    %v76 = vld [vmem:[#allocation6 + $0x18] sm:$0xf]
    %v77 = vld [vmem:[#allocation6 + $0x1c] sm:$0xf]
    %v78 = vld [vmem:[#allocation6 + $0x20] sm:$0xf]
    %v79 = vld [vmem:[#allocation6 + $0x24] sm:$0xf]
    %v80 = vld [vmem:[#allocation6 + $0x28] sm:$0xf]
    %v81 = vld [vmem:[#allocation6 + $0x2c] sm:$0xf]
    %v82 = vld [vmem:[#allocation6 + $0x30] sm:$0xf]
    %v83 = vld [vmem:[#allocation6 + $0x34] sm:$0xf]
    %v84 = vld [vmem:[#allocation6 + $0x38] sm:$0xf]
    %v85 = vld [vmem:[#allocation6 + $0x3c] sm:$0xf]
    %v88 = vunpack.c.l.b16 %v68
    %v89 = vunpack.c.l.b16 %v69
    %v90 = vpack.c.b16 %v89, %v88
    %v108 = vunpack.c.l.b16 %v70
    %v109 = vunpack.c.l.b16 %v71
    %v110 = vunpack.c.l.b16 %v72
    %v111 = vunpack.c.l.b16 %v73
    %v112 = vunpack.c.l.b16 %v74
    %v113 = vunpack.c.l.b16 %v75
    %v114 = vunpack.c.l.b16 %v76
    %v115 = vunpack.c.l.b16 %v77
    %v116 = vunpack.c.l.b16 %v78
    %v117 = vunpack.c.l.b16 %v79
    %v118 = vunpack.c.l.b16 %v80
    %v119 = vunpack.c.l.b16 %v81
    %v120 = vunpack.c.l.b16 %v82
    %v121 = vunpack.c.l.b16 %v83
    %v122 = vunpack.c.l.b16 %v84
    %v123 = vunpack.c.l.b16 %v85
    %v124 = vpack.c.b16 %v109, %v108
    %v125 = vpack.c.b16 %v111, %v110
    %v126 = vpack.c.b16 %v113, %v112
    %v127 = vpack.c.b16 %v115, %v114
    %v128 = vpack.c.b16 %v117, %v116
    %v129 = vpack.c.b16 %v119, %v118
    %v130 = vpack.c.b16 %v121, %v120
    %v131 = vpack.c.b16 %v123, %v122
    %140 = vmatpush.bf16.msra.mxu0 %v131
    %141 = vmatpush.bf16.msra.mxu0 %v130
    %142 = vmatpush.bf16.msra.mxu0 %v129
    %143 = vmatpush.bf16.msra.mxu0 %v128
    %144 = vmatpush.bf16.msra.mxu0 %v127
    %145 = vmatpush.bf16.msra.mxu0 %v126
    %146 = vmatpush.bf16.msra.mxu0 %v125
    %147 = vmatpush.bf16.msra.mxu0 %v124
    %148 = vmatmul.bf16.gmra.mxu0 %v90
    %v149 = vpop.f32.mrf.mxu0
    %v150 = vadd.f32 0.0, %v149
    %v151 = vpop.f32.mrf.mxu0
    %v152 = vadd.f32 0.0, %v151
    %153 = vdwg.mxu0
    %v154 = vadd.f32 %v66, %v150
    %v155 = vadd.f32 %v67, %v152
    %156 = vst [vmem:[#allocation2] sm:$0xff] %v154
    %157 = vst [vmem:[#allocation2 + $0x8] sm:$0xff] %v155
    // Predicated region
    $region30: #{tpu_custom_call.1} parent=1 // pred_check
      %p158 = pneg %p60
    $region31: #{tpu_custom_call.1} parent=1 // pred_check_branch
      %160 = sbr.rel (%p158) target = $region33
    $region32: #{tpu_custom_call.1} parent=1 // pred_region
      %v161 = vld [vmem:[#allocation8] sm:$0x3]
      %v162 = vld [vmem:[#allocation2] sm:$0xff]
      %v163 = vld [vmem:[#allocation2 + $0x8] sm:$0xff]
      %v164 = vperm.slane %v161, 0
      %v165 = vmul.f32 %v162, %v164
      %v166 = vmul.f32 %v163, %v164
      %v167 = vperm.slane %v161, 1
      %v168 = vadd.f32 %v165, %v167
      %v169 = vadd.f32 %v166, %v167
      %v170 = vmul.f32 %v168, 0.1
      %v171 = vmul.f32 %v169, 0.1
      %v172 = vmax.f32 %v168, %v170
      %v173 = vmax.f32 %v169, %v171
      %174 = vst [vmem:[#allocation9] sm:$0xff] %v172
      %175 = vst [vmem:[#allocation9 + $0x8] sm:$0xff] %v173
    $region33: #{tpu_custom_call.1} parent=1 // pred_fallthru
      _
    // Predicated region
    $region34: #{tpu_custom_call.1} parent=1 // pred_check
      _
    $region35: #{tpu_custom_call.1} parent=1 // pred_check_branch
      %177 = sbr.rel (0) target = $region37
    $region36: #{tpu_custom_call.1} parent=1 // pred_region
      %179 = vsyncadd [#allocation5], 0
      %s180 = sshll.u32 [#allocation9], 4
      %s181 = int_to_ptr.vmem [resolvable:$true] %s180
      %s182 = sshll.u32 %s3, 4
      %s183 = int_to_ptr.hbm [resolvable:$true] %s182
      %188 = dma.vmem_to_hbm [thread:$0]  %s181, 256, %s183, [#allocation5], 128, 128, 8
    $region37: #{tpu_custom_call.1} parent=1 // pred_fallthru
      _
    // Predicated region
    $region38: #{tpu_custom_call.1} parent=1 // pred_check
      _
    $region39: #{tpu_custom_call.1} parent=1 // pred_check_branch
      %190 = sbr.rel (0) target = $region41
    $region40: #{tpu_custom_call.1} parent=1 // pred_region
      %192 = dma.done [#allocation5], 256
    $region41: #{tpu_custom_call.1} parent=1 // pred_fallthru
      _
    %193 = vsyncpa [#allocation4], 1
    %194 = vsyncpa [#allocation7], 1
    %195 = vsyncpa [#allocation5], 1

</llo_original>
